<compile_context>
chip_gen: v5e
topology: v5e:2x2
jax: 0.10.0
libtpu: 0.0.40
codegen_flags: <defaults>
</compile_context>

<pallas_src>
import functools
import math

import jax
import jax.numpy as jnp
from jax.experimental import pallas as pl
from jax.experimental.pallas import tpu as pltpu


def _mlp_dims(length: int):
    """Replicates the size arithmetic in MLP.__init__."""
    num = 1
    n = int(length)
    l = float(length)
    while l > 2.5:
        l = l / 2.0
        num = num * 2
    num = int(num)
    return n, num, int(num / 4), 2


def _round_up(x: int, m: int) -> int:
    return ((x + m - 1) // m) * m


def mlp_kernel(xT_ref, w1t_ref, w2t_ref, w3t_ref, b_ref, o_ref, *, h1, h2):
    # xT_ref: (n, TILE_B) input tile, batch on lanes.
    # w*t_ref: transposed weights (out, in), fully VMEM-resident.
    # b_ref: packed biases (h1 + h2 + out, 1), broadcast over lanes.
    xT = xT_ref[...]
    b = b_ref[...]
    b1 = b[0:h1]                # (h1, 1)
    b2 = b[h1:h1 + h2]          # (h2, 1)
    b3 = b[h1 + h2:]            # (out, 1)

    # fc1 + relu : (h1, n) @ (n, TILE_B) -> (h1, TILE_B)   (lane-dense)
    a1 = jnp.maximum(
        jnp.dot(w1t_ref[...], xT, preferred_element_type=jnp.float32) + b1, 0.0)
    # fc2 + relu : (h2, h1) @ (h1, TILE_B) -> (h2, TILE_B)
    a2 = jnp.maximum(
        jnp.dot(w2t_ref[...], a1, preferred_element_type=jnp.float32) + b2, 0.0)
    # fc3 + relu : (out, h2) @ (h2, TILE_B) -> (out, TILE_B)
    a3 = jnp.maximum(
        jnp.dot(w3t_ref[...], a2, preferred_element_type=jnp.float32) + b3, 0.0)

    o_ref[...] = a3.astype(o_ref.dtype)


def mlp_forward(x, params, *, tile_b=2048):
    """x: (B, n) float32. Returns (B, 2) float32."""
    w1, b1, w2, b2, w3, b3 = (params["w1"], params["b1"], params["w2"],
                              params["b2"], params["w3"], params["b3"])
    n, h1 = w1.shape
    h2 = w2.shape[1]
    out_dim = w3.shape[1]
    B = x.shape[0]

    # Lane-dense batch tile: multiple of 128, capped at tile_b (fits any VMEM
    # budget: a (32, 2048) f32 tile is 256 KiB, double-buffered ~0.5 MiB).
    tb = min(tile_b, _round_up(max(B, 1), 128))
    padded_B = _round_up(B, tb)
    grid = (pl.cdiv(padded_B, tb),)

    # Batch-on-lanes layout (layout plumbing in the wrapper).
    xT = jnp.transpose(x)                      # (n, B)
    if padded_B != B:
        xT = jnp.pad(xT, ((0, 0), (0, padded_B - B)))

    w1t = jnp.transpose(w1)                    # (h1, n)
    w2t = jnp.transpose(w2)                    # (h2, h1)
    w3t = jnp.transpose(w3)                    # (out, h2)
    b_packed = jnp.concatenate(
        [b1.reshape(-1), b2.reshape(-1), b3.reshape(-1)]).reshape(-1, 1)

    flops = 2 * padded_B * (n * h1 + h1 * h2 + h2 * out_dim)
    weight_bytes = 4 * (n * h1 + h1 * h2 + h2 * out_dim + h1 + h2 + out_dim)
    bytes_accessed = 4 * padded_B * (n + out_dim) + weight_bytes

    kernel = functools.partial(mlp_kernel, h1=h1, h2=h2)

    outT = pl.pallas_call(
        kernel,
        out_shape=jax.ShapeDtypeStruct((out_dim, padded_B), jnp.float32),
        grid=grid,
        in_specs=[
            pl.BlockSpec((n, tb), lambda i: (0, i)),              # x: pipelined
            pl.BlockSpec((h1, n), lambda i: (0, 0)),              # weights: resident
            pl.BlockSpec((h2, h1), lambda i: (0, 0)),
            pl.BlockSpec((out_dim, h2), lambda i: (0, 0)),
            pl.BlockSpec((h1 + h2 + out_dim, 1), lambda i: (0, 0)),  # packed biases
        ],
        out_specs=pl.BlockSpec((out_dim, tb), lambda i: (0, i)),
        compiler_params=pltpu.CompilerParams(
            dimension_semantics=("parallel",)),
        cost_estimate=pl.CostEstimate(
            flops=flops, transcendentals=0, bytes_accessed=bytes_accessed),
    )(xT, w1t, w2t, w3t, b_packed)

    return jnp.transpose(outT)[:B]


def init_params(key, length):
    """Deterministic init mimicking nn.Linear's U(-1/sqrt(in), 1/sqrt(in))."""
    n, h1, h2, out = _mlp_dims(length)
    keys = jax.random.split(key, 6)

    def linear(kw, kb, fan_in, fan_out):
        bound = 1.0 / math.sqrt(fan_in)
        w = jax.random.uniform(kw, (fan_in, fan_out), jnp.float32, -bound, bound)
        b = jax.random.uniform(kb, (1, fan_out), jnp.float32, -bound, bound)
        return w, b

    w1, b1 = linear(keys[0], keys[1], n, h1)
    w2, b2 = linear(keys[2], keys[3], h1, h2)
    w3, b3 = linear(keys[4], keys[5], h2, out)
    return {"w1": w1, "b1": b1, "w2": w2, "b2": b2, "w3": w3, "b3": b3}


def reference_forward(x, params):
    h = jnp.maximum(x @ params["w1"] + params["b1"], 0.0)
    h = jnp.maximum(h @ params["w2"] + params["b2"], 0.0)
    h = jnp.maximum(h @ params["w3"] + params["b3"], 0.0)
    return h


if __name__ == "__main__":
    LENGTH = 32          # MLP(len=32) -> fc1: 32->16, fc2: 16->4, fc3: 4->2
    BATCH = 8

    key = jax.random.PRNGKey(0)
    k_x, k_p, k_x2 = jax.random.split(key, 3)

    params = init_params(k_p, LENGTH)

    # Small batch (pads up to one 128-lane tile).
    x = jax.random.normal(k_x, (BATCH, LENGTH), dtype=jnp.float32)
    out = jax.block_until_ready(mlp_forward(x, params))
    ref = reference_forward(x, params)
    assert out.shape == (BATCH, 2), out.shape
    assert jnp.allclose(out, ref, atol=1e-4, rtol=1e-4), "mismatch vs reference (B=8)"

    # Ragged batch exercising the padding/tiling path.
    x2 = jax.random.normal(k_x2, (300, LENGTH), dtype=jnp.float32)
    out2 = jax.block_until_ready(mlp_forward(x2, params))
    ref2 = reference_forward(x2, params)
    assert out2.shape == (300, 2), out2.shape
    assert jnp.allclose(out2, ref2, atol=1e-4, rtol=1e-4), "mismatch vs reference (B=300)"

    print("KERNEL_OK")
</pallas_src>

<mosaic_0001>
module attributes {stable_mosaic.version = 11 : i64} {
  func.func @mlp_kernel(%arg0: i32, %arg1: memref<32x128xf32, #tpu.memory_space<vmem>>, %arg2: memref<16x32xf32, #tpu.memory_space<vmem>>, %arg3: memref<4x16xf32, #tpu.memory_space<vmem>>, %arg4: memref<2x4xf32, #tpu.memory_space<vmem>>, %arg5: memref<22x1xf32, #tpu.memory_space<vmem>>, %arg6: memref<2x128xf32, #tpu.memory_space<vmem>>) attributes {dimension_semantics = [#tpu.dimension_semantics<parallel>], iteration_bounds = array<i64: 1>, scalar_prefetch = 0 : i64, scratch_operands = 0 : i64, tpu.core_type = #tpu.core_type<tc>, window_params = [{transform_indices = @transform_0, window_bounds = array<i64: 32, 128>}, {pipeline_mode = #tpu.pipeline_mode<synchronous>, transform_indices = @transform_1, window_bounds = array<i64: 16, 32>}, {pipeline_mode = #tpu.pipeline_mode<synchronous>, transform_indices = @transform_2, window_bounds = array<i64: 4, 16>}, {pipeline_mode = #tpu.pipeline_mode<synchronous>, transform_indices = @transform_3, window_bounds = array<i64: 2, 4>}, {pipeline_mode = #tpu.pipeline_mode<synchronous>, transform_indices = @transform_4, window_bounds = array<i64: 22, 1>}, {transform_indices = @transform_5, window_bounds = array<i64: 2, 128>}]} {
    %c0 = arith.constant 0 : index
    %c0_0 = arith.constant 0 : index
    %0 = vector.load %arg1[%c0, %c0_0] : memref<32x128xf32, #tpu.memory_space<vmem>>, vector<32x128xf32>
    %c0_1 = arith.constant 0 : index
    %c0_2 = arith.constant 0 : index
    %1 = vector.load %arg5[%c0_1, %c0_2] : memref<22x1xf32, #tpu.memory_space<vmem>>, vector<22x1xf32>
    %2 = vector.extract_strided_slice %1 {offsets = [0, 0], sizes = [16, 1], strides = [1, 1]} : vector<22x1xf32> to vector<16x1xf32>
    %3 = vector.extract_strided_slice %1 {offsets = [16, 0], sizes = [4, 1], strides = [1, 1]} : vector<22x1xf32> to vector<4x1xf32>
    %4 = vector.extract_strided_slice %1 {offsets = [20, 0], sizes = [2, 1], strides = [1, 1]} : vector<22x1xf32> to vector<2x1xf32>
    %c0_3 = arith.constant 0 : index
    %c0_4 = arith.constant 0 : index
    %5 = vector.load %arg2[%c0_3, %c0_4] : memref<16x32xf32, #tpu.memory_space<vmem>>, vector<16x32xf32>
    %cst = arith.constant dense<0.000000e+00> : vector<16x128xf32>
    %6 = tpu.matmul %5, %0, %cst {dimension_numbers = #tpu.dot_dimension_numbers<[1], [0], [0], [1], [0, 0, 1, 1], [], []>} : vector<16x32xf32>, vector<32x128xf32>, vector<16x128xf32> -> vector<16x128xf32>
    %7 = vector.broadcast %2 : vector<16x1xf32> to vector<16x128xf32>
    %8 = arith.addf %6, %7 : vector<16x128xf32>
    %cst_5 = arith.constant 0.000000e+00 : f32
    %9 = vector.broadcast %cst_5 : f32 to vector<16x128xf32>
    %10 = arith.maximumf %8, %9 : vector<16x128xf32>
    %c0_6 = arith.constant 0 : index
    %c0_7 = arith.constant 0 : index
    %11 = vector.load %arg3[%c0_6, %c0_7] : memref<4x16xf32, #tpu.memory_space<vmem>>, vector<4x16xf32>
    %cst_8 = arith.constant dense<0.000000e+00> : vector<4x128xf32>
    %12 = tpu.matmul %11, %10, %cst_8 {dimension_numbers = #tpu.dot_dimension_numbers<[1], [0], [0], [1], [0, 0, 1, 1], [], []>} : vector<4x16xf32>, vector<16x128xf32>, vector<4x128xf32> -> vector<4x128xf32>
    %13 = vector.broadcast %3 : vector<4x1xf32> to vector<4x128xf32>
    %14 = arith.addf %12, %13 : vector<4x128xf32>
    %cst_9 = arith.constant 0.000000e+00 : f32
    %15 = vector.broadcast %cst_9 : f32 to vector<4x128xf32>
    %16 = arith.maximumf %14, %15 : vector<4x128xf32>
    %c0_10 = arith.constant 0 : index
    %c0_11 = arith.constant 0 : index
    %17 = vector.load %arg4[%c0_10, %c0_11] : memref<2x4xf32, #tpu.memory_space<vmem>>, vector<2x4xf32>
    %cst_12 = arith.constant dense<0.000000e+00> : vector<2x128xf32>
    %18 = tpu.matmul %17, %16, %cst_12 {dimension_numbers = #tpu.dot_dimension_numbers<[1], [0], [0], [1], [0, 0, 1, 1], [], []>} : vector<2x4xf32>, vector<4x128xf32>, vector<2x128xf32> -> vector<2x128xf32>
    %19 = vector.broadcast %4 : vector<2x1xf32> to vector<2x128xf32>
    %20 = arith.addf %18, %19 : vector<2x128xf32>
    %cst_13 = arith.constant 0.000000e+00 : f32
    %21 = vector.broadcast %cst_13 : f32 to vector<2x128xf32>
    %22 = arith.maximumf %20, %21 : vector<2x128xf32>
    %c0_14 = arith.constant 0 : index
    %c0_15 = arith.constant 0 : index
    %23 = vector.load %arg6[%c0_14, %c0_15] : memref<2x128xf32, #tpu.memory_space<vmem>>, vector<2x128xf32>
    tpu.vector_store %arg6[%c0_14, %c0_15], %22 {strides = array<i32>} : memref<2x128xf32, #tpu.memory_space<vmem>>, vector<2x128xf32>,
    return
  }
  func.func @transform_0(%arg0: i32) -> (i32, i32) {
    %c0_i32 = arith.constant 0 : i32
    %c0_i32_0 = arith.constant 0 : i32
    return %c0_i32, %arg0 : i32, i32
  }
  func.func @transform_1(%arg0: i32) -> (i32, i32) {
    %c0_i32 = arith.constant 0 : i32
    %c0_i32_0 = arith.constant 0 : i32
    %c0_i32_1 = arith.constant 0 : i32
    return %c0_i32, %c0_i32_0 : i32, i32
  }
  func.func @transform_2(%arg0: i32) -> (i32, i32) {
    %c0_i32 = arith.constant 0 : i32
    %c0_i32_0 = arith.constant 0 : i32
    %c0_i32_1 = arith.constant 0 : i32
    return %c0_i32, %c0_i32_0 : i32, i32
  }
  func.func @transform_3(%arg0: i32) -> (i32, i32) {
    %c0_i32 = arith.constant 0 : i32
    %c0_i32_0 = arith.constant 0 : i32
    %c0_i32_1 = arith.constant 0 : i32
    return %c0_i32, %c0_i32_0 : i32, i32
  }
  func.func @transform_4(%arg0: i32) -> (i32, i32) {
    %c0_i32 = arith.constant 0 : i32
    %c0_i32_0 = arith.constant 0 : i32
    %c0_i32_1 = arith.constant 0 : i32
    return %c0_i32, %c0_i32_0 : i32, i32
  }
  func.func @transform_5(%arg0: i32) -> (i32, i32) {
    %c0_i32 = arith.constant 0 : i32
    %c0_i32_0 = arith.constant 0 : i32
    return %c0_i32, %arg0 : i32, i32
  }
}

</mosaic_0001>

<llo_original>
// kernel: tpu_custom_call.1
$region0: #{tpu_custom_call.1}
  #allocation0 [shape = 'u32[]', space=smem, size = 0x4, offset = 0x4, fixed_abs, tag = 'smem constant byte address 0x4 - core index']
  #allocation1 [shape = 'u32[72,128]{1,0:T(1,128)}', space=vmem, size = 0x9000, scoped, tag = 'internal scratch']
  %s0 = inlined_call_operand.hbm [shape: f32[32,128], index: 0, kind: input, shape index: {}]
  %s1 = inlined_call_operand.vmem [shape: f32[16,32], index: 1, kind: input, shape index: {}]
  %s2 = inlined_call_operand.vmem [shape: f32[4,16], index: 2, kind: input, shape index: {}]
  %s3 = inlined_call_operand.vmem [shape: f32[2,4], index: 3, kind: input, shape index: {}]
  %s4 = inlined_call_operand.vmem [shape: f32[22,1], index: 4, kind: input, shape index: {}]
  %s5 = inlined_call_operand.hbm [shape: f32[2,128], index: 5, kind: output, shape index: {}]
  %s6 = sld [smem:[#allocation0]]
  $region34: #{tpu_custom_call.1} parent=0
    _
  %s8 = ssub.s32 1, %s6
  %s9 = scalar_select 0, %s8, %s6
  $region1: #{tpu_custom_call.1} parent=0
    #allocation2 [shape = 'u8[16384]{0}', space=vmem, size = 0x4000, scoped, tag = 'input window, operand 0, single buffered']
    #allocation3 [shape = 's32[1]{0}', space=sflag, size = 0x4, scoped, tag = 'scoped memory for tpu_custom_call.1']
    #allocation4 [shape = 's32[1]{0}', space=sflag, size = 0x4, scoped, tag = 'scoped memory for tpu_custom_call.1']
    #allocation5 [shape = 'u8[1024]{0}', space=vmem, size = 0x400, scoped, tag = 'output window, operand 0, single buffered']
    %10 = vsyncpa [#allocation3], 0
    %11 = vsyncpa [#allocation4], 0
    // Predicated region
    $region2: #{tpu_custom_call.1} parent=1 // pred_check
      _
    $region3: #{tpu_custom_call.1} parent=1 // pred_check_branch
      %13 = sbr.rel (0) target = $region5
    $region4: #{tpu_custom_call.1} parent=1 // pred_region
      %15 = vsyncadd [#allocation3], 0
      %s16 = sshll.u32 %s0, 4
      %s17 = int_to_ptr.hbm [resolvable:$true] %s16
      %s18 = sshll.u32 [#allocation2], 4
      %s19 = int_to_ptr.vmem [resolvable:$true] %s18
      %24 = dma.hbm_to_vmem [thread:$0]  %s17, 512, %s19, [#allocation3], 128, 128, 8
    $region5: #{tpu_custom_call.1} parent=1 // pred_fallthru
      _
    // Predicated region
    $region6: #{tpu_custom_call.1} parent=1 // pred_check
      _
    $region7: #{tpu_custom_call.1} parent=1 // pred_check_branch
      %26 = sbr.rel (0) target = $region9
    $region8: #{tpu_custom_call.1} parent=1 // pred_region
      _
    $region9: #{tpu_custom_call.1} parent=1 // pred_fallthru
      _
    // Predicated region
    $region10: #{tpu_custom_call.1} parent=1 // pred_check
      _
    $region11: #{tpu_custom_call.1} parent=1 // pred_check_branch
      %28 = sbr.rel (0) target = $region13
    $region12: #{tpu_custom_call.1} parent=1 // pred_region
      _
    $region13: #{tpu_custom_call.1} parent=1 // pred_fallthru
      _
    // Predicated region
    $region14: #{tpu_custom_call.1} parent=1 // pred_check
      _
    $region15: #{tpu_custom_call.1} parent=1 // pred_check_branch
      %30 = sbr.rel (0) target = $region17
    $region16: #{tpu_custom_call.1} parent=1 // pred_region
      _
    $region17: #{tpu_custom_call.1} parent=1 // pred_fallthru
      _
    // Predicated region
    $region18: #{tpu_custom_call.1} parent=1 // pred_check
      _
    $region19: #{tpu_custom_call.1} parent=1 // pred_check_branch
      %32 = sbr.rel (0) target = $region21
    $region20: #{tpu_custom_call.1} parent=1 // pred_region
      _
    $region21: #{tpu_custom_call.1} parent=1 // pred_fallthru
      _
    // Predicated region
    $region22: #{tpu_custom_call.1} parent=1 // pred_check
      _
    $region23: #{tpu_custom_call.1} parent=1 // pred_check_branch
      %34 = sbr.rel (0) target = $region25
    $region24: #{tpu_custom_call.1} parent=1 // pred_region
      %36 = dma.done [#allocation3], 512
    $region25: #{tpu_custom_call.1} parent=1 // pred_fallthru
      _
    %v37 = vld [vmem:[#allocation2] sm:$0xff]
    %v38 = vld [vmem:[#allocation2 + $0x8] sm:$0xff]
    %v39 = vld [vmem:[#allocation2 + $0x10] sm:$0xff]
    %v40 = vld [vmem:[#allocation2 + $0x18] sm:$0xff]
    %v41 = vld [vmem:[%s4] sm:$0xff]
    %v42 = vld [vmem:[%s4 + $0x8] sm:$0xff]
    %v43 = vld [vmem:[%s4 + $0x10] sm:$0x3f]
    %v44 = vld [vmem:[%s1] sm:$0xff]
    %v45 = vld [vmem:[%s1 + $0x8] sm:$0xff]
    %47 = vset.pattern.permute.xlu0 0
    %48 = vperm.xlu0 %47, %v41
    %v49 = vpop.permute.xlu0 %48
    %52 = vset.pattern.permute.xlu0 0
    %53 = vperm.xlu0 %52, %v42
    %v54 = vpop.permute.xlu0 %53
    %vm56 = vcmask 261120
    %v58 = vsel %vm56, %v44, 0
    %v61 = vsel %vm56, %v45, 0
    %63 = vmatpush.msra.mxu0 0.0
    %64 = vmatpush.msra.mxu0 0.0
    %65 = vmatpush.msra.mxu0 0.0
    %66 = vmatpush.msra.mxu0 0.0
    %67 = vmatpush.msra.mxu0 0.0
    %68 = vmatpush.msra.mxu0 0.0
    %69 = vmatpush.msra.mxu0 0.0
    %70 = vmatpush.msra.mxu0 0.0
    %71 = vmatpush.msra.mxu0 0.0
    %72 = vmatpush.msra.mxu0 0.0
    %73 = vmatpush.msra.mxu0 0.0
    %74 = vmatpush.msra.mxu0 0.0
    %75 = vmatpush.msra.mxu0 %v40
    %76 = vmatpush.msra.mxu0 %v39
    %77 = vmatpush.msra.mxu0 %v38
    %78 = vmatpush.msra.mxu0 %v37
    %79 = vmatmul.f32.gmra.mxu0 %v58
    %v80 = vpop.f32.mrf.mxu0
    %v81 = vadd.f32 %v49, %v80
    %82 = vmatmul.f32.gmra.mxu0 %v61
    %v83 = vpop.f32.mrf.mxu0
    %v84 = vadd.f32 %v54, %v83
    %85 = vdwg.mxu0
    %v86 = vmax.f32 %v81, 0.0
    %v87 = vmax.f32 %v84, 0.0
    %v88 = vld [vmem:[%s2] sm:$0xf]
    %90 = vset.pattern.permute.xlu0 0
    %91 = vperm.xlu0 %90, %v43
    %v92 = vpop.permute.xlu0 %91
    %vm94 = vcmask 130048
    %v96 = vsel %vm94, %v88, 0
    %98 = vmatpush.msra.mxu0 0.0
    %99 = vmatpush.msra.mxu0 0.0
    %100 = vmatpush.msra.mxu0 0.0
    %101 = vmatpush.msra.mxu0 0.0
    %102 = vmatpush.msra.mxu0 0.0
    %103 = vmatpush.msra.mxu0 0.0
    %104 = vmatpush.msra.mxu0 0.0
    %105 = vmatpush.msra.mxu0 0.0
    %106 = vmatpush.msra.mxu0 0.0
    %107 = vmatpush.msra.mxu0 0.0
    %108 = vmatpush.msra.mxu0 0.0
    %109 = vmatpush.msra.mxu0 0.0
    %110 = vmatpush.msra.mxu0 0.0
    %111 = vmatpush.msra.mxu0 0.0
    %112 = vmatpush.msra.mxu0 %v87
    %113 = vmatpush.msra.mxu0 %v86
    %114 = vmatmul.f32.gmra.mxu0 %v96
    %v115 = vpop.f32.mrf.mxu0
    %v116 = vadd.f32 %v92, %v115
    %117 = vdwg.mxu0
    %v118 = vmax.f32 %v116, 0.0
    %v119 = vld [vmem:[%s3] sm:$0x3]
    %v120 = vrot.slane %v92, 4
    %vm122 = vcmask 31744
    %v124 = vsel %vm122, %v119, 0
    %vm126 = vcmask 1043456
    %v128 = vsel %vm126, %v118, 0
    %130 = vmatpush.msra.mxu0 0.0
    %131 = vmatpush.msra.mxu0 0.0
    %132 = vmatpush.msra.mxu0 0.0
    %133 = vmatpush.msra.mxu0 0.0
    %134 = vmatpush.msra.mxu0 0.0
    %135 = vmatpush.msra.mxu0 0.0
    %136 = vmatpush.msra.mxu0 0.0
    %137 = vmatpush.msra.mxu0 0.0
    %138 = vmatpush.msra.mxu0 0.0
    %139 = vmatpush.msra.mxu0 0.0
    %140 = vmatpush.msra.mxu0 0.0
    %141 = vmatpush.msra.mxu0 0.0
    %142 = vmatpush.msra.mxu0 0.0
    %143 = vmatpush.msra.mxu0 0.0
    %144 = vmatpush.msra.mxu0 0.0
    %145 = vmatpush.msra.mxu0 %v128
    %146 = vmatmul.f32.gmra.mxu0 %v124
    %v147 = vpop.f32.mrf.mxu0
    %v148 = vadd.f32 %v120, %v147
    %149 = vdwg.mxu0
    %v150 = vmax.f32 %v148, 0.0
    %151 = vst [vmem:[#allocation5] sm:$0x3] %v150
    // Predicated region
    $region26: #{tpu_custom_call.1} parent=1 // pred_check
      _
    $region27: #{tpu_custom_call.1} parent=1 // pred_check_branch
      %153 = sbr.rel (0) target = $region29
    $region28: #{tpu_custom_call.1} parent=1 // pred_region
      %155 = vsyncadd [#allocation4], 0
      %s157 = sshll.u32 [#allocation5], 4
      %s158 = int_to_ptr.vmem [resolvable:$true] %s157
      %s159 = sshll.u32 %s5, 4
      %s160 = int_to_ptr.hbm [resolvable:$true] %s159
      %162 = dma.vmem_to_hbm [thread:$0]  %s158, 32, %s160, [#allocation4]
    $region29: #{tpu_custom_call.1} parent=1 // pred_fallthru
      _
    // Predicated region
    $region30: #{tpu_custom_call.1} parent=1 // pred_check
      _
    $region31: #{tpu_custom_call.1} parent=1 // pred_check_branch
      %164 = sbr.rel (0) target = $region33
    $region32: #{tpu_custom_call.1} parent=1 // pred_region
      %166 = dma.done [#allocation4], 32
    $region33: #{tpu_custom_call.1} parent=1 // pred_fallthru
      _
    %167 = vsyncpa [#allocation3], 1
    %168 = vsyncpa [#allocation4], 1

</llo_original>
